<compile_context>
chip_gen: v7x
topology: tpu7x:2x2x1
jax: 0.10.0
libtpu: 0.0.40
codegen_flags: <defaults>
</compile_context>

<pallas_src>
import jax
import jax.numpy as jnp
from jax.experimental import pallas as pl
from jax.experimental.pallas import tpu as pltpu


def _copy_block_kernel(x_ref, o_ref):
    # Input and output blocks have identical shapes; boundary blocks (batch
    # remainder, lane padding past out_features) are masked by Pallas, so a
    # straight copy is exact.
    o_ref[...] = x_ref[...]


def _sublane_multiple(dtype) -> int:
    # fp32 -> 8, bf16/fp16 -> 16, int8/fp8 -> 32 rows per packed sublane tile.
    itemsize = jnp.dtype(dtype).itemsize
    return max(8, 32 // max(itemsize, 1))


def _round_up(n: int, m: int) -> int:
    return ((n + m - 1) // m) * m


def _round_down(n: int, m: int) -> int:
    return (n // m) * m


def keyboard_encoder(x: jax.Array, out_features: int, *, force_pallas: bool = False) -> jax.Array:
    """Equivalent of _KeyboardEncoder(in_features, out_features).forward(x)."""
    B, in_features = x.shape
    assert 0 < out_features <= in_features

    dtype = x.dtype
    itemsize = jnp.dtype(dtype).itemsize

    if not force_pallas:
        if out_features == in_features:
            # Identity: no HBM traffic at all.
            return x
        if B * out_features * itemsize < 64 * 1024:
            # Launch + per-grid-step overhead dominates a <64 KiB copy; a plain
            # slice is free for XLA to fuse into neighbouring ops.
            return jax.lax.slice(x, (0, 0), (B, out_features))

    sub = _sublane_multiple(dtype)

    # ---- feature tile width (block last dim: multiple of 128 or full width) ----
    if out_features == in_features or out_features % 128 == 0:
        tc = out_features                       # exact width, legal for both refs
    else:
        # Round up to the 128-lane rule: narrows the input DMA to only the
        # columns actually needed (plus <128 of padding), never all of
        # in_features.  Masked boundary handling keeps the output exact.
        tc = _round_up(out_features, 128)

    # ---- VMEM budget: double-buffered (input + output) tiles -------------------
    VMEM_BUDGET = 12 * 1024 * 1024              # portable across v5e/v6e/v7x
    if 4 * sub * tc * itemsize > VMEM_BUDGET:
        # Even a single sublane-group of rows is too wide -> tile the feature
        # axis as well (tc stays a multiple of 128, so blocks remain legal).
        tc = max(128, _round_down(VMEM_BUDGET // (4 * sub * itemsize), 128))

    # ---- batch tile: enough grid steps for pipelining + dual-TC sharding -------
    TARGET_ROW_TILES = 8                        # >= 4 tiles per TC on v7x
    max_rows = max(sub, _round_down(VMEM_BUDGET // (4 * tc * itemsize), sub))
    tb = min(B, max_rows, _round_up(pl.cdiv(B, TARGET_ROW_TILES), sub))
    if tb < B:
        tb = max(sub, _round_down(tb, sub))     # legal partial-batch block height

    grid = (pl.cdiv(B, tb), pl.cdiv(out_features, tc))

    read_cols = min(in_features, grid[1] * tc)
    cost = pl.CostEstimate(
        flops=0,
        transcendentals=0,
        bytes_accessed=(B * read_cols + B * out_features) * itemsize,
    )

    return pl.pallas_call(
        _copy_block_kernel,
        out_shape=jax.ShapeDtypeStruct((B, out_features), dtype),
        grid=grid,
        in_specs=[pl.BlockSpec((tb, tc), lambda i, j: (i, j))],
        out_specs=pl.BlockSpec((tb, tc), lambda i, j: (i, j)),
        compiler_params=pltpu.CompilerParams(
            # Batch tiles are independent -> shard across both TCs on v7x;
            # free/no-op on single-TC v5e/v6e.
            dimension_semantics=("parallel", "arbitrary"),
            vmem_limit_bytes=32 * 1024 * 1024,
        ),
        cost_estimate=cost,
    )(x)


if __name__ == "__main__":
    key = jax.random.PRNGKey(0)
    k1, k2, k3, k4 = jax.random.split(key, 4)

    # Case 1: module's typical small usage -> plain-slice short-circuit path.
    x1 = jax.random.normal(k1, (8, 32), dtype=jnp.float32)
    y1 = jax.block_until_ready(keyboard_encoder(x1, 16))
    assert y1.shape == (8, 16) and y1.dtype == x1.dtype
    assert jnp.array_equal(y1, x1[:, :16])

    # Case 2: same slice with the Pallas kernel forced (exercises the masked
    # lane boundary + batch tiling at small width).
    x2 = jax.random.normal(k2, (64, 32), dtype=jnp.float32)
    y2 = jax.block_until_ready(keyboard_encoder(x2, 16, force_pallas=True))
    assert jnp.array_equal(y2, x2[:, :16])

    # Case 3: 128-aligned out_features -> exact-width blocks, 8 row tiles.
    x3 = jax.random.normal(k3, (512, 256), dtype=jnp.float32)
    y3 = jax.block_until_ready(keyboard_encoder(x3, 128))
    assert y3.shape == (512, 128)
    assert jnp.array_equal(y3, x3[:, :128])

    # Case 4: non-aligned out_features -> input DMA narrowed to 256 of 512 cols.
    x4 = jax.random.normal(k4, (512, 512), dtype=jnp.float32)
    y4 = jax.block_until_ready(keyboard_encoder(x4, 200))
    assert y4.shape == (512, 200)
    assert jnp.array_equal(y4, x4[:, :200])

    # Case 5: identity short-circuit.
    y5 = jax.block_until_ready(keyboard_encoder(x4, 512))
    assert y5.shape == x4.shape
    assert jnp.array_equal(y5, x4)

    print("KERNEL_OK")
</pallas_src>

<mosaic_0001>
module attributes {stable_mosaic.version = 11 : i64} {
  func.func @_copy_block_kernel(%arg0: i32, %arg1: i32, %arg2: memref<8x128xf32, #tpu.memory_space<vmem>>, %arg3: memref<8x128xf32, #tpu.memory_space<vmem>>) attributes {dimension_semantics = [#tpu.dimension_semantics<parallel>, #tpu.dimension_semantics<arbitrary>], iteration_bounds = array<i64: 8, 1>, scalar_prefetch = 0 : i64, scratch_operands = 0 : i64, tpu.core_type = #tpu.core_type<tc>, window_params = [{transform_indices = @transform_0, window_bounds = array<i64: 8, 128>}, {transform_indices = @transform_1, window_bounds = array<i64: 8, 128>}]} {
    %c0 = arith.constant 0 : index
    %c0_0 = arith.constant 0 : index
    %0 = vector.load %arg2[%c0, %c0_0] : memref<8x128xf32, #tpu.memory_space<vmem>>, vector<8x128xf32>
    %c0_1 = arith.constant 0 : index
    %c0_2 = arith.constant 0 : index
    %1 = vector.load %arg3[%c0_1, %c0_2] : memref<8x128xf32, #tpu.memory_space<vmem>>, vector<8x128xf32>
    tpu.vector_store %arg3[%c0_1, %c0_2], %0 {strides = array<i32>} : memref<8x128xf32, #tpu.memory_space<vmem>>, vector<8x128xf32>,
    return
  }
  func.func @transform_0(%arg0: i32, %arg1: i32) -> (i32, i32) {
    %c0_i32 = arith.constant 0 : i32
    return %arg0, %arg1 : i32, i32
  }
  func.func @transform_1(%arg0: i32, %arg1: i32) -> (i32, i32) {
    %c0_i32 = arith.constant 0 : i32
    return %arg0, %arg1 : i32, i32
  }
}

</mosaic_0001>

<llo_original>
// kernel: tpu_custom_call.1
$region0: #{tpu_custom_call.1}
  #allocation0 [shape = 'u32[]', space=smem, size = 0x4, offset = 0x4, fixed_abs, tag = 'smem constant byte address 0x4 - core index']
  #allocation1 [shape = 'u32[144,128]{1,0:T(1,128)}', space=vmem, size = 0x12000, scoped, tag = 'internal scratch']
  %s0 = inlined_call_operand.vmem [shape: f32[64,32], index: 0, kind: input, shape index: {}]
  %s1 = inlined_call_operand.vmem [shape: f32[64,16], index: 1, kind: output, shape index: {}]
  %s2 = sld [smem:[#allocation0]]
  $region37: #{tpu_custom_call.1} parent=0
    _
  %s4 = ssub.s32 1, %s2
  %s5 = scalar_select 0, %s4, %s2
  loop: start=0, step=1, limit=10
  $region2: #{tpu_custom_call.1} parent=0 // loop_pre_header
    _
  $region3: #{tpu_custom_call.1} parent=0 // loop_header
    %s7 = sphi 0, %s11
    %p8 = scmp.ge.s32.totalorder %s7, 10
    %s14 = sphi 0, %s26
    %s15 = sphi 0, %s22
    %s16 = sphi 0, %s14
    %s17 = sphi 0, %s15
    %s18 = sphi 0, %s16
    %s19 = sphi 0, %s17
    %s31 = sphi 0, %s33
    %s34 = sphi 0, %s31
    %s35 = sphi 0, %s34
    %s51 = sphi 0, %s35
    %s59 = sphi 0, %s61
    %s62 = sphi 0, %s59
    %s63 = sphi 0, %s62
    %s79 = sphi 0, %s63
  $region4: #{tpu_custom_call.1} parent=0 // loop_header_branch
    %10 = sbr.rel (%p8) target = $region8
  $region5: #{tpu_custom_call.1} parent=0 // loop_body
    %s12 = ssub.s32 %s7, 1
    %s13 = ssub.s32 %s7, 2
    %s20 = sadd.s32 1, %s15
    %p21 = scmp.ge.s32.totalorder %s20, 1
    %s22 = scalar_select %p21, 0, %s20
    %s23 = sadd.s32 1, %s14
    %s24 = scalar_select %p21, %s23, %s14
    %p25 = scmp.ge.s32.totalorder %s24, 8
    %s26 = scalar_select %p25, 0, %s24
    %s27 = ssub.s32 %s14, %s26
    %s28 = ssub.s32 %s15, %s22
    %s29 = sor.u32 %s27, %s28
    %p30 = scmp.eq.s32.totalorder %s29, 0
    %s32 = sadd.s32 %s31, 1
    %s33 = scalar_select %p30, %s31, %s32
    %p36 = pneg %p30
    %p37 = scmp.eq.s32.totalorder %s7, 7
    %p38 = por %p36, %p37
    %p39 = scmp.ne.s32.totalorder %s31, %s34
    %p40 = scmp.eq.s32.totalorder %s7, 0
    %p41 = por %p39, %p40
    %p42 = scmp.ne.s32.totalorder %s31, %s34
    %p43 = scmp.eq.s32.totalorder %s12, 7
    %p44 = por %p42, %p43
    %p45 = scmp.ne.s32.totalorder %s34, %s35
    %p46 = scmp.eq.s32.totalorder %s12, 0
    %p47 = por %p45, %p46
    %p48 = scmp.ne.s32.totalorder %s34, %s35
    %p49 = scmp.eq.s32.totalorder %s13, 7
    %p50 = por %p48, %p49
    %p52 = scmp.ne.s32.totalorder %s35, %s51
    %p53 = scmp.eq.s32.totalorder %s13, 0
    %p54 = por %p52, %p53
    %s55 = ssub.s32 %s14, %s26
    %s56 = ssub.s32 %s15, %s22
    %s57 = sor.u32 %s55, %s56
    %p58 = scmp.eq.s32.totalorder %s57, 0
    %s60 = sadd.s32 %s59, 1
    %s61 = scalar_select %p58, %s59, %s60
    %p64 = pneg %p58
    %p65 = scmp.eq.s32.totalorder %s7, 7
    %p66 = por %p64, %p65
    %p67 = scmp.ne.s32.totalorder %s59, %s62
    %p68 = scmp.eq.s32.totalorder %s7, 0
    %p69 = por %p67, %p68
    %p70 = scmp.ne.s32.totalorder %s59, %s62
    %p71 = scmp.eq.s32.totalorder %s12, 7
    %p72 = por %p70, %p71
    %p73 = scmp.ne.s32.totalorder %s62, %s63
    %p74 = scmp.eq.s32.totalorder %s12, 0
    %p75 = por %p73, %p74
    %p76 = scmp.ne.s32.totalorder %s62, %s63
    %p77 = scmp.eq.s32.totalorder %s13, 7
    %p78 = por %p76, %p77
    %p80 = scmp.ne.s32.totalorder %s63, %s79
    %p81 = scmp.eq.s32.totalorder %s13, 0
    %p82 = por %p80, %p81
    %p83 = scmp.le.s32.totalorder 1, %s7
    %p84 = scmp.lt.s32.totalorder %s7, 9
    %p85 = pnand %p83, %p84
    %p86 = pneg %p85
    // Predicated region
    $region9: #{tpu_custom_call.1} parent=5 // pred_check
      _
    $region10: #{tpu_custom_call.1} parent=5 // pred_check_branch
      %88 = sbr.rel (%p85) target = $region12
    $region11: #{tpu_custom_call.1} parent=5 // pred_region
      %s89 = ssub.s32 %s7, 1
    $region12: #{tpu_custom_call.1} parent=5 // pred_fallthru
      _
    %p90 = scmp.lt.s32.totalorder %s7, 8
    // Predicated region
    $region13: #{tpu_custom_call.1} parent=5 // pred_check
      %p91 = pneg %p90
    $region14: #{tpu_custom_call.1} parent=5 // pred_check_branch
      %93 = sbr.rel (%p91) target = $region16
    $region15: #{tpu_custom_call.1} parent=5 // pred_region
      // Predicated region
      $region17: #{tpu_custom_call.1} parent=15 // pred_check
        %p94 = pneg %p41
      $region18: #{tpu_custom_call.1} parent=15 // pred_check_branch
        %96 = sbr.rel (%p94) target = $region20
      $region19: #{tpu_custom_call.1} parent=15 // pred_region
        %p97 = scmp.lt.s32.totalorder %s14, 7
        %s98 = scalar_select %p97, %s14, 7
        %p99 = scmp.lt.s32.totalorder %s15, 0
        %s100 = scalar_select %p99, %s15, 0
        %s101 = sadd.s32 %s100, %s98
        %s102 = smul.addr %s101, 8
        %s103 = scalar_lea.vmem %s0, %s102
      $region20: #{tpu_custom_call.1} parent=15 // pred_fallthru
        _
    $region16: #{tpu_custom_call.1} parent=5 // pred_fallthru
      _
    %p104 = scmp.le.s32.totalorder 1, %s7
    %p105 = scmp.lt.s32.totalorder %s7, 9
    %p106 = pnand %p104, %p105
    %p107 = pneg %p106
    // Predicated region
    $region21: #{tpu_custom_call.1} parent=5 // pred_check
      _
    $region22: #{tpu_custom_call.1} parent=5 // pred_check_branch
      %109 = sbr.rel (%p106) target = $region24
    $region23: #{tpu_custom_call.1} parent=5 // pred_region
      %s110 = ssub.s32 %s7, 1
      %p111 = scmp.lt.s32.totalorder %s16, 7
      %s112 = scalar_select %p111, %s16, 7
      %p113 = scmp.lt.s32.totalorder %s17, 0
      %s114 = scalar_select %p113, %s17, 0
      %s115 = sadd.s32 %s114, %s112
      %s116 = smul.addr %s115, 8
      %s117 = scalar_lea.vmem %s0, %s116
      %p118 = pneg %p47
      %p119 = pneg %p44
      %p120 = pneg %p75
      %p121 = pneg %p72
      %p122 = scmp.lt.s32.totalorder %s16, 7
      %s123 = scalar_select %p122, %s16, 7
      %p124 = scmp.lt.s32.totalorder %s17, 0
      %s125 = scalar_select %p124, %s17, 0
      %s126 = sadd.s32 %s125, %s123
      %s127 = smul.addr %s126, 8
      %s128 = scalar_lea.vmem %s1, %s127
      %p129 = scmp.lt.s32.totalorder %s16, 7
      %s130 = scalar_select %p129, %s16, 7
      %p131 = scmp.lt.s32.totalorder %s17, 0
      %s132 = scalar_select %p131, %s17, 0
      %s133 = sadd.s32 %s132, %s130
      %s134 = smul.addr %s133, 8
      %s135 = scalar_lea.vmem %s0, %s134
      %p136 = scmp.lt.s32.totalorder %s16, 7
      %s137 = scalar_select %p136, %s16, 7
      %p138 = scmp.lt.s32.totalorder %s17, 0
      %s139 = scalar_select %p138, %s17, 0
      %s140 = sadd.s32 %s139, %s137
      %s141 = smul.addr %s140, 8
      %s142 = scalar_lea.vmem %s1, %s141
      %v143 = vld [vmem:[%s135] sm:$0xff]
      %144 = vst [vmem:[%s142] sm:$0xff] %v143
      %p145 = scmp.lt.s32.totalorder %s16, 7
      %s146 = scalar_select %p145, %s16, 7
      %p147 = scmp.lt.s32.totalorder %s17, 0
      %s148 = scalar_select %p147, %s17, 0
      %s149 = sadd.s32 %s148, %s146
      %s150 = smul.addr %s149, 8
      %s151 = scalar_lea.vmem %s1, %s150
      // Predicated region
      $region25: #{tpu_custom_call.1} parent=23 // pred_check
        %p152 = pneg %p72
      $region26: #{tpu_custom_call.1} parent=23 // pred_check_branch
        %154 = sbr.rel (%p152) target = $region28
      $region27: #{tpu_custom_call.1} parent=23 // pred_region
        _
      $region28: #{tpu_custom_call.1} parent=23 // pred_fallthru
        _
    $region24: #{tpu_custom_call.1} parent=5 // pred_fallthru
      _
    %p155 = scmp.le.s32.totalorder 2, %s7
    // Predicated region
    $region29: #{tpu_custom_call.1} parent=5 // pred_check
      %p156 = pneg %p155
    $region30: #{tpu_custom_call.1} parent=5 // pred_check_branch
      %158 = sbr.rel (%p156) target = $region32
    $region31: #{tpu_custom_call.1} parent=5 // pred_region
      %s159 = ssub.s32 %s7, 2
      // Predicated region
      $region33: #{tpu_custom_call.1} parent=31 // pred_check
        %p160 = pneg %p78
      $region34: #{tpu_custom_call.1} parent=31 // pred_check_branch
        %162 = sbr.rel (%p160) target = $region36
      $region35: #{tpu_custom_call.1} parent=31 // pred_region
        %p163 = scmp.lt.s32.totalorder %s18, 7
        %s164 = scalar_select %p163, %s18, 7
        %p165 = scmp.lt.s32.totalorder %s19, 0
        %s166 = scalar_select %p165, %s19, 0
        %s167 = sadd.s32 %s166, %s164
        %s168 = smul.addr %s167, 8
        %s169 = scalar_lea.vmem %s1, %s168
      $region36: #{tpu_custom_call.1} parent=31 // pred_fallthru
        _
    $region32: #{tpu_custom_call.1} parent=5 // pred_fallthru
      _
  $region6: #{tpu_custom_call.1} parent=0 // loop_footer
    %s11 = sadd.s32 1, %s7
  $region7: #{tpu_custom_call.1} parent=0 // loop_footer_branch
    %6 = sbr.rel target = $region3
  $region8: #{tpu_custom_call.1} parent=0 // loop_exit
    _

</llo_original>
